<compile_context>
chip_gen: v7x
topology: tpu7x:2x2x1
jax: 0.10.0
libtpu: 0.0.40
codegen_flags: <defaults>
</compile_context>

<pallas_src>
import jax
import jax.numpy as jnp
from jax import lax
from jax.experimental import pallas as pl
from jax.experimental.pallas import tpu as pltpu

EPS = 1e-7

# Padded VMEM bytes of one grid step's input blocks (pred tile + target tile).
# Double buffering makes 2x of this in flight.
_STEP_BYTES = 8 * 1024 * 1024
# Cap on any single (rows x padded_C) f32 compute temporary inside the kernel.
_CHUNK_BYTES = 1 * 1024 * 1024
# Scoped-VMEM request: > v5e's 16 MiB default, == v6e/v7x default, well under
# v7x's 64 MiB physical VMEM.
_VMEM_LIMIT = 32 * 1024 * 1024
# Leading grid axis: 2 TensorCores on v7x; extra sequential step elsewhere.
_NUM_CORES = 2


def _round_up(x, m):
    return ((x + m - 1) // m) * m


def _tiling(n, c, itemsize):
    """Return (tile_n, chunk): DMA-block rows and in-kernel compute-chunk rows."""
    padded_c = _round_up(c, 128)                       # lanes occupied in VMEM
    chunk = max(8, min(1024, (_CHUNK_BYTES // (padded_c * 4)) // 8 * 8))
    # padded bytes per row: pred block row + (tile_n,1) int32 target row (128 lanes)
    row_bytes = padded_c * itemsize + 128 * 4
    max_rows = max(chunk, (_STEP_BYTES // row_bytes) // chunk * chunk)
    if n < 16:
        return n, n                                    # single tiny block (full dims)
    if n <= chunk:
        half = min(n, _round_up(-(-n // _NUM_CORES), 8))
        return half, half                              # 2 blocks, one per core
    half = _round_up(-(-n // _NUM_CORES), chunk)       # chunk-multiple >= ceil(n/2)
    return min(max_rows, half), chunk                  # chunk-multiple, <= byte budget


# ---------------------------------------------------------------------------
# Cross-entropy (mean NLL of the target class)
# ---------------------------------------------------------------------------
def _make_ce_kernel(n_total, tile_n, chunk):
    n_sub = tile_n // chunk

    def kernel(pred_ref, tgt_ref, out_ref):
        cc = pl.program_id(0)
        i = pl.program_id(1)
        base = (cc * pl.num_programs(1) + i) * tile_n   # global row of block row 0

        @pl.when(i == 0)
        def _():
            out_ref[...] = jnp.zeros_like(out_ref)

        def body(s, acc):
            r0 = pl.multiple_of(s * chunk, 8)
            x = pred_ref[pl.ds(r0, chunk), :].astype(jnp.float32)   # (chunk, C)
            t = tgt_ref[pl.ds(r0, chunk), :]                        # (chunk, 1) i32
            row = lax.broadcasted_iota(jnp.int32, (chunk, 1), 0) + (base + s * chunk)
            valid = row < n_total                                   # masks padded rows
            # numerically stable log-sum-exp per row
            m = jnp.max(x, axis=1, keepdims=True)
            lse = m + jnp.log(jnp.sum(jnp.exp(x - m), axis=1, keepdims=True))
            # target logit via compare+select (no float one-hot materialization)
            cls = lax.broadcasted_iota(jnp.int32, x.shape, 1)
            tgt_logit = jnp.sum(jnp.where(cls == t, x, 0.0), axis=1, keepdims=True)
            # invalid rows may hold garbage; the select yields exactly 0 for them
            return acc + jnp.sum(jnp.where(valid, lse - tgt_logit, 0.0))

        tile_sum = lax.fori_loop(0, n_sub, body, jnp.float32(0.0))
        out_ref[...] += tile_sum                         # scalar per-core accumulator

    return kernel


# ---------------------------------------------------------------------------
# Macro soft-F1 loss (kernel produces per-class tp and sum_p partials)
# ---------------------------------------------------------------------------
def _make_f1_kernel(n_total, tile_n, chunk):
    n_sub = tile_n // chunk

    def kernel(pred_ref, tgt_ref, tp_ref, sp_ref):
        cc = pl.program_id(0)
        i = pl.program_id(1)
        base = (cc * pl.num_programs(1) + i) * tile_n
        c = pred_ref.shape[1]

        @pl.when(i == 0)
        def _():
            tp_ref[...] = jnp.zeros_like(tp_ref)
            sp_ref[...] = jnp.zeros_like(sp_ref)

        def body(s, carry):
            tp_acc, sp_acc = carry
            r0 = pl.multiple_of(s * chunk, 8)
            x = pred_ref[pl.ds(r0, chunk), :].astype(jnp.float32)   # (chunk, C)
            t = tgt_ref[pl.ds(r0, chunk), :]                        # (chunk, 1) i32
            row = lax.broadcasted_iota(jnp.int32, (chunk, 1), 0) + (base + s * chunk)
            valid = row < n_total
            # softmax: one approximate (EUP) reciprocal per row + VPU multiplies
            m = jnp.max(x, axis=1, keepdims=True)
            e = jnp.exp(x - m)
            inv = pl.reciprocal(jnp.sum(e, axis=1, keepdims=True), approx=True)
            p = jnp.where(valid, e * inv, 0.0)                      # (chunk, C)
            cls = lax.broadcasted_iota(jnp.int32, x.shape, 1)
            hit = jnp.logical_and(cls == t, valid)                  # one-hot(target)
            tp_acc = tp_acc + jnp.sum(jnp.where(hit, p, 0.0), axis=0, keepdims=True)
            sp_acc = sp_acc + jnp.sum(p, axis=0, keepdims=True)
            return tp_acc, sp_acc

        zero = jnp.zeros((1, c), jnp.float32)
        tp_t, sp_t = lax.fori_loop(0, n_sub, body, (zero, zero))
        tp_ref[...] += tp_t[jnp.newaxis]                 # (1,1,C) resident block
        sp_ref[...] += sp_t[jnp.newaxis]

    return kernel


# ---------------------------------------------------------------------------
# pallas_call wrappers
# ---------------------------------------------------------------------------
def _grid_and_specs(n, c, tile_n):
    num_blocks = pl.cdiv(n, tile_n)
    steps = pl.cdiv(num_blocks, _NUM_CORES)
    grid = (_NUM_CORES, steps)

    def blk(cc, i):
        # Iterations past the last real block re-read it (clamp) and are fully
        # masked inside the kernel (all of their global row indices are >= n).
        return jnp.minimum(cc * steps + i, num_blocks - 1), 0

    in_specs = [
        pl.BlockSpec((tile_n, c), blk),
        pl.BlockSpec((tile_n, 1), blk),
    ]
    return grid, in_specs


def _compiler_params():
    return pltpu.CompilerParams(
        dimension_semantics=("parallel", "arbitrary"),
        vmem_limit_bytes=_VMEM_LIMIT,
    )


def cross_entropy_loss(pred, target):
    n, c = pred.shape
    tgt_col = target.astype(jnp.int32).reshape(n, 1)
    tile_n, chunk = _tiling(n, c, jnp.dtype(pred.dtype).itemsize)
    grid, in_specs = _grid_and_specs(n, c, tile_n)

    out = pl.pallas_call(
        _make_ce_kernel(n, tile_n, chunk),
        out_shape=jax.ShapeDtypeStruct((_NUM_CORES, 1, 1), jnp.float32),
        grid_spec=pltpu.PrefetchScalarGridSpec(
            num_scalar_prefetch=0,
            grid=grid,
            in_specs=in_specs,
            out_specs=pl.BlockSpec((1, 1, 1), lambda cc, i: (cc, 0, 0)),
        ),
        compiler_params=_compiler_params(),
    )(pred, tgt_col)                     # pred stays in its native dtype
    return jnp.sum(out) / n


def f1_loss(pred, target):
    n, c = pred.shape
    tgt = target.astype(jnp.int32)
    tgt_col = tgt.reshape(n, 1)
    tile_n, chunk = _tiling(n, c, jnp.dtype(pred.dtype).itemsize)
    grid, in_specs = _grid_and_specs(n, c, tile_n)

    tp_out, sp_out = pl.pallas_call(
        _make_f1_kernel(n, tile_n, chunk),
        out_shape=(
            jax.ShapeDtypeStruct((_NUM_CORES, 1, c), jnp.float32),
            jax.ShapeDtypeStruct((_NUM_CORES, 1, c), jnp.float32),
        ),
        grid_spec=pltpu.PrefetchScalarGridSpec(
            num_scalar_prefetch=0,
            grid=grid,
            in_specs=in_specs,
            out_specs=[
                pl.BlockSpec((1, 1, c), lambda cc, i: (cc, 0, 0)),
                pl.BlockSpec((1, 1, c), lambda cc, i: (cc, 0, 0)),
            ],
        ),
        compiler_params=_compiler_params(),
    )(pred, tgt_col)

    # Cross-core reduce + tiny per-class finalize math (C elements) in JAX.
    tp = jnp.sum(tp_out[:, 0, :], axis=0)
    sp = jnp.sum(sp_out[:, 0, :], axis=0)
    cy = jnp.zeros((c,), jnp.float32).at[tgt].add(1.0)   # per-class label counts
    fp = sp - tp
    fn = cy - tp
    precision = tp / (tp + fp + EPS)
    recall = tp / (tp + fn + EPS)
    f1 = 2.0 * precision * recall / (precision + recall + EPS)
    f1 = jnp.clip(f1, EPS, 1.0 - EPS)
    return 1.0 - jnp.mean(f1)


class Loss:
    """JAX/Pallas port of the PyTorch `Loss` wrapper."""

    def __init__(self, loss_type="CE", **kwargs):
        self.loss_type = loss_type

    def __call__(self, pred, target, **kwargs):
        if self.loss_type == "CE":
            return cross_entropy_loss(pred, target)
        elif self.loss_type == "F1":
            return f1_loss(pred, target)
        raise ValueError(f"unknown loss_type {self.loss_type}")


# ---------------------------------------------------------------------------
# Pure-JAX references + self-test
# ---------------------------------------------------------------------------
def _ce_ref(pred, target):
    logp = jax.nn.log_softmax(pred.astype(jnp.float32), axis=1)
    return -jnp.mean(
        jnp.take_along_axis(logp, target[:, None].astype(jnp.int32), axis=1)
    )


def _f1_ref(pred, target):
    c = pred.shape[1]
    y = jax.nn.one_hot(target, c, dtype=jnp.float32)
    p = jax.nn.softmax(pred.astype(jnp.float32), axis=1)
    tp = jnp.sum(y * p, axis=0)
    fp = jnp.sum((1.0 - y) * p, axis=0)
    fn = jnp.sum(y * (1.0 - p), axis=0)
    precision = tp / (tp + fp + EPS)
    recall = tp / (tp + fn + EPS)
    f1 = 2.0 * precision * recall / (precision + recall + EPS)
    f1 = jnp.clip(f1, EPS, 1.0 - EPS)
    return 1.0 - jnp.mean(f1)


if __name__ == "__main__":
    def _check(n, c, seed, ce_tol, f1_tol):
        kp, kt = jax.random.split(jax.random.PRNGKey(seed))
        pred = jax.random.normal(kp, (n, c), dtype=jnp.float32)
        target = jax.random.randint(kt, (n,), 0, c, dtype=jnp.int32)
        ce = Loss("CE")(pred, target)
        f1 = Loss("F1")(pred, target)
        jax.block_until_ready(ce)
        jax.block_until_ready(f1)
        assert jnp.allclose(ce, _ce_ref(pred, target), atol=ce_tol, rtol=ce_tol), (n, c, "CE")
        # F1 uses approx reciprocal in-kernel -> slightly looser tolerance
        assert jnp.allclose(f1, _f1_ref(pred, target), atol=f1_tol, rtol=f1_tol), (n, c, "F1")

    # small shapes consistent with the module (batch=8, num_classes=32)
    _check(8, 32, 0, 1e-5, 1e-3)
    # two-block path: one block per core partition + masked partial block
    _check(1000, 32, 1, 1e-4, 1e-3)
    # multi-step path: >2 blocks, clamped overflow block, chunked inner loop
    _check(12000, 200, 2, 1e-4, 1e-3)

    print("KERNEL_OK")
</pallas_src>

<mosaic_0001>
module attributes {stable_mosaic.version = 11 : i64} {
  func.func @kernel(%arg0: i32, %arg1: i32, %arg2: memref<8x32xf32, #tpu.memory_space<vmem>>, %arg3: memref<8x1xi32, #tpu.memory_space<vmem>>, %arg4: memref<1x1x1xf32, #tpu.memory_space<vmem>>) attributes {dimension_semantics = [#tpu.dimension_semantics<parallel>, #tpu.dimension_semantics<arbitrary>], iteration_bounds = array<i64: 2, 1>, scalar_prefetch = 0 : i64, scratch_operands = 0 : i64, tpu.core_type = #tpu.core_type<tc>, window_params = [{transform_indices = @transform_0, window_bounds = array<i64: 8, 32>}, {transform_indices = @transform_1, window_bounds = array<i64: 8, 1>}, {transform_indices = @transform_2, window_bounds = array<i64: 1, 1, 1>}]} {
    %c1_i32 = arith.constant 1 : i32
    %0 = arith.muli %arg0, %c1_i32 : i32
    %1 = arith.addi %0, %arg1 : i32
    %c8_i32 = arith.constant 8 : i32
    %2 = arith.muli %1, %c8_i32 : i32
    %c0_i32 = arith.constant 0 : i32
    %3 = arith.cmpi eq, %arg1, %c0_i32 : i32
    %4 = arith.extui %3 : i1 to i32
    %c0_i32_0 = arith.constant 0 : i32
    %5 = arith.cmpi ne, %4, %c0_i32_0 : i32
    scf.if %5 {
      %cst_19 = arith.constant 0.000000e+00 : f32
      %47 = vector.broadcast %cst_19 : f32 to vector<1x1x1xf32>
      %c0_20 = arith.constant 0 : index
      %c0_21 = arith.constant 0 : index
      %c0_22 = arith.constant 0 : index
      %48 = vector.load %arg4[%c0_20, %c0_21, %c0_22] : memref<1x1x1xf32, #tpu.memory_space<vmem>>, vector<1x1x1xf32>
      tpu.vector_store %arg4[%c0_20, %c0_21, %c0_22], %47 {strides = array<i32>} : memref<1x1x1xf32, #tpu.memory_space<vmem>>, vector<1x1x1xf32>,
    } else {
    }
    %cst = arith.constant 0.000000e+00 : f32
    %c0_i32_1 = arith.constant 0 : i32
    %c8_i32_2 = arith.constant 8 : i32
    %6 = arith.muli %c0_i32_1, %c8_i32_2 : i32
    %7 = tpu.assume_multiple %6, 8 : i32
    %8 = arith.index_cast %7 : i32 to index
    %c0 = arith.constant 0 : index
    %9 = vector.load %arg2[%8, %c0] : memref<8x32xf32, #tpu.memory_space<vmem>>, vector<8x32xf32>
    %10 = arith.index_cast %7 : i32 to index
    %c0_3 = arith.constant 0 : index
    %11 = vector.load %arg3[%10, %c0_3] : memref<8x1xi32, #tpu.memory_space<vmem>>, vector<8x1xi32>
    %12 = tpu.iota {dimensions = array<i32: 0>} : vector<8x1xi32>
    %c8_i32_4 = arith.constant 8 : i32
    %13 = arith.muli %c0_i32_1, %c8_i32_4 : i32
    %14 = arith.addi %2, %13 : i32
    %15 = vector.broadcast %14 : i32 to vector<8x1xi32>
    %16 = arith.addi %12, %15 : vector<8x1xi32>
    %c8_i32_5 = arith.constant 8 : i32
    %17 = vector.broadcast %c8_i32_5 : i32 to vector<8x1xi32>
    %18 = arith.cmpi slt, %16, %17 : vector<8x1xi32>
    %cst_6 = arith.constant dense<0xFF800000> : vector<8xf32>
    %19 = vector.multi_reduction <maximumf>, %9, %cst_6 [1] : vector<8x32xf32> to vector<8xf32>
    %20 = vector.shape_cast %19 : vector<8xf32> to vector<8x1xf32>
    %21 = vector.broadcast %20 : vector<8x1xf32> to vector<8x32xf32>
    %22 = arith.subf %9, %21 : vector<8x32xf32>
    %23 = math.exp %22 : vector<8x32xf32>
    %cst_7 = arith.constant dense<0.000000e+00> : vector<8xf32>
    %24 = vector.multi_reduction <add>, %23, %cst_7 [1] : vector<8x32xf32> to vector<8xf32>
    %25 = vector.shape_cast %24 : vector<8xf32> to vector<8x1xf32>
    %26 = math.log %25 : vector<8x1xf32>
    %27 = arith.addf %20, %26 : vector<8x1xf32>
    %28 = tpu.iota {dimensions = array<i32: 1>} : vector<8x32xi32>
    %29 = vector.broadcast %11 : vector<8x1xi32> to vector<8x32xi32>
    %30 = arith.cmpi eq, %28, %29 : vector<8x32xi32>
    %cst_8 = arith.constant 0.000000e+00 : f32
    %31 = vector.broadcast %cst_8 : f32 to vector<8x32xf32>
    %32 = arith.select %30, %9, %31 : vector<8x32xi1>, vector<8x32xf32>
    %cst_9 = arith.constant dense<0.000000e+00> : vector<8xf32>
    %33 = vector.multi_reduction <add>, %32, %cst_9 [1] : vector<8x32xf32> to vector<8xf32>
    %34 = vector.shape_cast %33 : vector<8xf32> to vector<8x1xf32>
    %35 = arith.subf %27, %34 : vector<8x1xf32>
    %cst_10 = arith.constant 0.000000e+00 : f32
    %36 = vector.broadcast %cst_10 : f32 to vector<8x1xf32>
    %37 = arith.select %18, %35, %36 : vector<8x1xi1>, vector<8x1xf32>
    %38 = vector.shape_cast %37 : vector<8x1xf32> to vector<1x8x1xf32>
    %cst_11 = arith.constant dense<0.000000e+00> : vector<1xf32>
    %39 = vector.multi_reduction <add>, %38, %cst_11 [1, 2] : vector<1x8x1xf32> to vector<1xf32>
    %40 = vector.shape_cast %39 : vector<1xf32> to vector<1x1x1xf32>
    %41 = vector.extract %40[0, 0, 0] : f32 from vector<1x1x1xf32>
    %42 = arith.addf %cst, %41 : f32
    %c1_i32_12 = arith.constant 1 : i32
    %c0_13 = arith.constant 0 : index
    %c0_14 = arith.constant 0 : index
    %c0_15 = arith.constant 0 : index
    %43 = vector.load %arg4[%c0_13, %c0_14, %c0_15] : memref<1x1x1xf32, #tpu.memory_space<vmem>>, vector<1x1x1xf32>
    %44 = vector.broadcast %42 : f32 to vector<1x1x1xf32>
    %45 = arith.addf %43, %44 : vector<1x1x1xf32>
    %c0_16 = arith.constant 0 : index
    %c0_17 = arith.constant 0 : index
    %c0_18 = arith.constant 0 : index
    %46 = vector.load %arg4[%c0_16, %c0_17, %c0_18] : memref<1x1x1xf32, #tpu.memory_space<vmem>>, vector<1x1x1xf32>
    tpu.vector_store %arg4[%c0_16, %c0_17, %c0_18], %45 {strides = array<i32>} : memref<1x1x1xf32, #tpu.memory_space<vmem>>, vector<1x1x1xf32>,
    return
  }
  func.func @transform_0(%arg0: i32, %arg1: i32) -> (i32, i32) {
    %c1_i32 = arith.constant 1 : i32
    %0 = arith.muli %arg0, %c1_i32 : i32
    %1 = arith.addi %0, %arg1 : i32
    %c0_i32 = arith.constant 0 : i32
    %2 = arith.minsi %1, %c0_i32 : i32
    %c0_i32_0 = arith.constant 0 : i32
    %c0_i32_1 = arith.constant 0 : i32
    return %2, %c0_i32_0 : i32, i32
  }
  func.func @transform_1(%arg0: i32, %arg1: i32) -> (i32, i32) {
    %c1_i32 = arith.constant 1 : i32
    %0 = arith.muli %arg0, %c1_i32 : i32
    %1 = arith.addi %0, %arg1 : i32
    %c0_i32 = arith.constant 0 : i32
    %2 = arith.minsi %1, %c0_i32 : i32
    %c0_i32_0 = arith.constant 0 : i32
    %c0_i32_1 = arith.constant 0 : i32
    return %2, %c0_i32_0 : i32, i32
  }
  func.func @transform_2(%arg0: i32, %arg1: i32) -> (i32, i32, i32) {
    %c0_i32 = arith.constant 0 : i32
    %c0_i32_0 = arith.constant 0 : i32
    %c0_i32_1 = arith.constant 0 : i32
    return %arg0, %c0_i32, %c0_i32_0 : i32, i32, i32
  }
}

</mosaic_0001>

<llo_original>
// kernel: tpu_custom_call.1
$region0: #{tpu_custom_call.1}
  #allocation0 [shape = 'u32[]', space=smem, size = 0x4, offset = 0x4, fixed_abs, tag = 'smem constant byte address 0x4 - core index']
  #allocation1 [shape = 'u32[144,128]{1,0:T(1,128)}', space=vmem, size = 0x12000, scoped, tag = 'internal scratch']
  %s0 = inlined_call_operand.vmem [shape: f32[8,32], index: 0, kind: input, shape index: {}]
  %s1 = inlined_call_operand.vmem [shape: s32[8,1], index: 1, kind: input, shape index: {}]
  %s2 = inlined_call_operand.vmem [shape: f32[2,1,1], index: 2, kind: output, shape index: {}]
  %s3 = sld [smem:[#allocation0]]
  $region45: #{tpu_custom_call.1} parent=0
    _
  %s5 = ssub.s32 1, %s3
  %s6 = scalar_select 0, %s5, %s3
  loop: start=0, step=1, limit=4
  $region2: #{tpu_custom_call.1} parent=0 // loop_pre_header
    _
  $region3: #{tpu_custom_call.1} parent=0 // loop_header
    %s8 = sphi 0, %s12
    %p9 = scmp.ge.s32.totalorder %s8, 4
    %s15 = sphi 0, %s27
    %s16 = sphi 0, %s23
    %s17 = sphi 0, %s15
    %s18 = sphi 0, %s16
    %s19 = sphi 0, %s17
    %s20 = sphi 0, %s18
    %s36 = sphi 0, %s38
    %s39 = sphi 0, %s36
    %s40 = sphi 0, %s39
    %s56 = sphi 0, %s40
    %s68 = sphi 0, %s70
    %s71 = sphi 0, %s68
    %s72 = sphi 0, %s71
    %s88 = sphi 0, %s72
    %s94 = sphi 0, %s96
    %s97 = sphi 0, %s94
    %s98 = sphi 0, %s97
    %s114 = sphi 0, %s98
  $region4: #{tpu_custom_call.1} parent=0 // loop_header_branch
    %11 = sbr.rel (%p9) target = $region8
  $region5: #{tpu_custom_call.1} parent=0 // loop_body
    %s13 = ssub.s32 %s8, 1
    %s14 = ssub.s32 %s8, 2
    %s21 = sadd.s32 1, %s16
    %p22 = scmp.ge.s32.totalorder %s21, 1
    %s23 = scalar_select %p22, 0, %s21
    %s24 = sadd.s32 1, %s15
    %s25 = scalar_select %p22, %s24, %s15
    %p26 = scmp.ge.s32.totalorder %s25, 2
    %s27 = scalar_select %p26, 0, %s25
    %s28 = sadd.s32 %s15, %s16
    %p29 = scmp.lt.s32.totalorder %s28, 0
    %s30 = scalar_select %p29, %s28, 0
    %s31 = sadd.s32 %s27, %s23
    %p32 = scmp.lt.s32.totalorder %s31, 0
    %s33 = scalar_select %p32, %s31, 0
    %s34 = ssub.s32 %s30, %s33
    %p35 = scmp.eq.s32.totalorder %s34, 0
    %s37 = sadd.s32 %s36, 1
    %s38 = scalar_select %p35, %s36, %s37
    %p41 = pneg %p35
    %p42 = scmp.eq.s32.totalorder %s8, 1
    %p43 = por %p41, %p42
    %p44 = scmp.ne.s32.totalorder %s36, %s39
    %p45 = scmp.eq.s32.totalorder %s8, 0
    %p46 = por %p44, %p45
    %p47 = scmp.ne.s32.totalorder %s36, %s39
    %p48 = scmp.eq.s32.totalorder %s13, 1
    %p49 = por %p47, %p48
    %p50 = scmp.ne.s32.totalorder %s39, %s40
    %p51 = scmp.eq.s32.totalorder %s13, 0
    %p52 = por %p50, %p51
    %p53 = scmp.ne.s32.totalorder %s39, %s40
    %p54 = scmp.eq.s32.totalorder %s14, 1
    %p55 = por %p53, %p54
    %p57 = scmp.ne.s32.totalorder %s40, %s56
    %p58 = scmp.eq.s32.totalorder %s14, 0
    %p59 = por %p57, %p58
    %s60 = sadd.s32 %s15, %s16
    %p61 = scmp.lt.s32.totalorder %s60, 0
    %s62 = scalar_select %p61, %s60, 0
    %s63 = sadd.s32 %s27, %s23
    %p64 = scmp.lt.s32.totalorder %s63, 0
    %s65 = scalar_select %p64, %s63, 0
    %s66 = ssub.s32 %s62, %s65
    %p67 = scmp.eq.s32.totalorder %s66, 0
    %s69 = sadd.s32 %s68, 1
    %s70 = scalar_select %p67, %s68, %s69
    %p73 = pneg %p67
    %p74 = scmp.eq.s32.totalorder %s8, 1
    %p75 = por %p73, %p74
    %p76 = scmp.ne.s32.totalorder %s68, %s71
    %p77 = scmp.eq.s32.totalorder %s8, 0
    %p78 = por %p76, %p77
    %p79 = scmp.ne.s32.totalorder %s68, %s71
    %p80 = scmp.eq.s32.totalorder %s13, 1
    %p81 = por %p79, %p80
    %p82 = scmp.ne.s32.totalorder %s71, %s72
    %p83 = scmp.eq.s32.totalorder %s13, 0
    %p84 = por %p82, %p83
    %p85 = scmp.ne.s32.totalorder %s71, %s72
    %p86 = scmp.eq.s32.totalorder %s14, 1
    %p87 = por %p85, %p86
    %p89 = scmp.ne.s32.totalorder %s72, %s88
    %p90 = scmp.eq.s32.totalorder %s14, 0
    %p91 = por %p89, %p90
    %s92 = ssub.s32 %s15, %s27
    %p93 = scmp.eq.s32.totalorder %s92, 0
    %s95 = sadd.s32 %s94, 1
    %s96 = scalar_select %p93, %s94, %s95
    %p99 = pneg %p93
    %p100 = scmp.eq.s32.totalorder %s8, 1
    %p101 = por %p99, %p100
    %p102 = scmp.ne.s32.totalorder %s94, %s97
    %p103 = scmp.eq.s32.totalorder %s8, 0
    %p104 = por %p102, %p103
    %p105 = scmp.ne.s32.totalorder %s94, %s97
    %p106 = scmp.eq.s32.totalorder %s13, 1
    %p107 = por %p105, %p106
    %p108 = scmp.ne.s32.totalorder %s97, %s98
    %p109 = scmp.eq.s32.totalorder %s13, 0
    %p110 = por %p108, %p109
    %p111 = scmp.ne.s32.totalorder %s97, %s98
    %p112 = scmp.eq.s32.totalorder %s14, 1
    %p113 = por %p111, %p112
    %p115 = scmp.ne.s32.totalorder %s98, %s114
    %p116 = scmp.eq.s32.totalorder %s14, 0
    %p117 = por %p115, %p116
    %p118 = scmp.le.s32.totalorder 1, %s8
    %p119 = scmp.lt.s32.totalorder %s8, 3
    %p120 = pnand %p118, %p119
    %p121 = pneg %p120
    // Predicated region
    $region9: #{tpu_custom_call.1} parent=5 // pred_check
      _
    $region10: #{tpu_custom_call.1} parent=5 // pred_check_branch
      %123 = sbr.rel (%p120) target = $region12
    $region11: #{tpu_custom_call.1} parent=5 // pred_region
      %s124 = ssub.s32 %s8, 1
    $region12: #{tpu_custom_call.1} parent=5 // pred_fallthru
      _
    %p125 = scmp.lt.s32.totalorder %s8, 2
    // Predicated region
    $region13: #{tpu_custom_call.1} parent=5 // pred_check
      %p126 = pneg %p125
    $region14: #{tpu_custom_call.1} parent=5 // pred_check_branch
      %128 = sbr.rel (%p126) target = $region16
    $region15: #{tpu_custom_call.1} parent=5 // pred_region
      // Predicated region
      $region17: #{tpu_custom_call.1} parent=15 // pred_check
        %p129 = pneg %p46
      $region18: #{tpu_custom_call.1} parent=15 // pred_check_branch
        %131 = sbr.rel (%p129) target = $region20
      $region19: #{tpu_custom_call.1} parent=15 // pred_region
        %s132 = sadd.s32 %s15, %s16
        %p133 = scmp.lt.s32.totalorder %s132, 0
        %s134 = scalar_select %p133, %s132, 0
        %p135 = scmp.lt.s32.totalorder %s134, 0
        %s136 = scalar_select %p135, %s134, 0
        %s137 = smul.addr %s136, 8
        %s138 = scalar_lea.vmem %s0, %s137
        %s139 = sadd.s32 %s15, %s16
        %p140 = scmp.lt.s32.totalorder %s139, 0
        %s141 = scalar_select %p140, %s139, 0
      $region20: #{tpu_custom_call.1} parent=15 // pred_fallthru
        _
      // Predicated region
      $region21: #{tpu_custom_call.1} parent=15 // pred_check
        %p142 = pneg %p78
      $region22: #{tpu_custom_call.1} parent=15 // pred_check_branch
        %144 = sbr.rel (%p142) target = $region24
      $region23: #{tpu_custom_call.1} parent=15 // pred_region
        %s145 = sadd.s32 %s15, %s16
        %p146 = scmp.lt.s32.totalorder %s145, 0
        %s147 = scalar_select %p146, %s145, 0
        %p148 = scmp.lt.s32.totalorder %s147, 0
        %s149 = scalar_select %p148, %s147, 0
        %s150 = smul.addr %s149, 8
        %s151 = scalar_lea.vmem %s1, %s150
        %s152 = sadd.s32 %s15, %s16
        %p153 = scmp.lt.s32.totalorder %s152, 0
        %s154 = scalar_select %p153, %s152, 0
      $region24: #{tpu_custom_call.1} parent=15 // pred_fallthru
        _
    $region16: #{tpu_custom_call.1} parent=5 // pred_fallthru
      _
    %p155 = scmp.le.s32.totalorder 1, %s8
    %p156 = scmp.lt.s32.totalorder %s8, 3
    %p157 = pnand %p155, %p156
    %p158 = pneg %p157
    // Predicated region
    $region25: #{tpu_custom_call.1} parent=5 // pred_check
      _
    $region26: #{tpu_custom_call.1} parent=5 // pred_check_branch
      %160 = sbr.rel (%p157) target = $region28
    $region27: #{tpu_custom_call.1} parent=5 // pred_region
      %s161 = ssub.s32 %s8, 1
      %s162 = sadd.s32 %s17, %s18
      %p163 = scmp.lt.s32.totalorder %s162, 0
      %s164 = scalar_select %p163, %s162, 0
      %p165 = scmp.lt.s32.totalorder %s164, 0
      %s166 = scalar_select %p165, %s164, 0
      %s167 = smul.addr %s166, 8
      %s168 = scalar_lea.vmem %s0, %s167
      %p169 = pneg %p52
      %p170 = pneg %p49
      %s171 = sadd.s32 %s17, %s18
      %p172 = scmp.lt.s32.totalorder %s171, 0
      %s173 = scalar_select %p172, %s171, 0
      %p174 = scmp.lt.s32.totalorder %s173, 0
      %s175 = scalar_select %p174, %s173, 0
      %s176 = smul.addr %s175, 8
      %s177 = scalar_lea.vmem %s1, %s176
      %p178 = pneg %p84
      %p179 = pneg %p81
      %p180 = pneg %p110
      %p181 = pneg %p107
      %p182 = scmp.lt.s32.totalorder %s17, 1
      %s183 = scalar_select %p182, %s17, 1
      %s184 = scalar_lea.vmem %s2, %s183
      %s185 = sadd.s32 %s17, %s18
      %p186 = scmp.lt.s32.totalorder %s185, 0
      %s187 = scalar_select %p186, %s185, 0
      %p188 = scmp.lt.s32.totalorder %s187, 0
      %s189 = scalar_select %p188, %s187, 0
      %s190 = smul.addr %s189, 8
      %s191 = scalar_lea.vmem %s0, %s190
      %s192 = sadd.s32 %s17, %s18
      %p193 = scmp.lt.s32.totalorder %s192, 0
      %s194 = scalar_select %p193, %s192, 0
      %s195 = sadd.s32 %s17, %s18
      %p196 = scmp.lt.s32.totalorder %s195, 0
      %s197 = scalar_select %p196, %s195, 0
      %p198 = scmp.lt.s32.totalorder %s197, 0
      %s199 = scalar_select %p198, %s197, 0
      %s200 = smul.addr %s199, 8
      %s201 = scalar_lea.vmem %s1, %s200
      %s202 = sadd.s32 %s17, %s18
      %p203 = scmp.lt.s32.totalorder %s202, 0
      %s204 = scalar_select %p203, %s202, 0
      %p205 = scmp.lt.s32.totalorder %s17, 1
      %s206 = scalar_select %p205, %s17, 1
      %s207 = scalar_lea.vmem %s2, %s206
      %s208 = sadd.s32 %s17, %s18
      %s209 = smul.u32 %s208, 8
      %p210 = scmp.eq.s32.totalorder %s18, 0
      // Predicated region
      $region29: #{tpu_custom_call.1} parent=27 // pred_check
        %p211 = pneg %p210
      $region30: #{tpu_custom_call.1} parent=27 // pred_check_branch
        %213 = sbr.rel (%p211) target = $region32
      $region31: #{tpu_custom_call.1} parent=27 // pred_region
        %vm214 = vcmask 0
        %215 = vst.msk [vmem:[%s207] sm:$0x1] %vm214, 0.0
      $region32: #{tpu_custom_call.1} parent=27 // pred_fallthru
        _
      %v216 = vld [vmem:[%s191] sm:$0xff]
      %v217 = vld [vmem:[%s201] sm:$0xff]
      %v218 = vlaneseq
      %v219 = vshrl.u32 %v218, 7
      %v220 = vstv %s209
      %v221 = vadd.s32 %v219, %v220
      %vm222 = vcmp.lt.s32.totalorder %v221, 8
      %vm223 = vcmask 261120
      %v224 = vsel %vm223, %v216, -inf
      %225 = vmax.xlane.f32.xlu0 %v224
      %v226 = vpop.xlane.xlu0 %225
      %v227 = vsub.f32 %v216, %v226
      %v228 = vmul.f32 %v227, 1.442695
      %v229 = vpow.pop %v228
      %v230 = vsel %vm223, %v229, 0.0
      %231 = vadd.xlane.f32.xlu0 %v230
      %v232 = vpop.xlane.xlu0 %231
      %v233 = vlog2.pop %v232
      %v234 = vmul.f32 %v233, 0.6931472
      %v235 = vadd.f32 %v226, %v234
      %v236 = vlaneseq
      %v237 = vand.u32 %v236, 127
      %238 = vset.pattern.permute.xlu0 0
      %239 = vperm.xlu0 %238, %v217
      %v240 = vpop.permute.xlu0 %239
      %vm241 = vcmp.eq.s32.totalorder %v237, %v240
      %v242 = vsel %vm241, %v216, 0.0
      %v243 = vsel %vm223, %v242, 0.0
      %244 = vadd.xlane.f32.xlu0 %v243
      %v245 = vpop.xlane.xlu0 %244
      %v246 = vsub.f32 %v235, %v245
      %v247 = vsel %vm222, %v246, 0.0
      %vm248 = vcmask 7168
      %v249 = vsel %vm248, %v247, 0.0
      %250 = vadd.xlane.f32.xlu0 %v249
      %v251 = vpop.xlane.xlu0 %250
      %v252 = vrot.slane %v251, 4
      %v253 = vadd.f32 %v251, %v252
      %v254 = vrot.slane %v253, 2
      %v255 = vadd.f32 %v253, %v254
      %v256 = vrot.slane %v255, 1
      %v257 = vadd.f32 %v255, %v256
      %s258 = vtos %v257
      %s259 = sadd.f32 %s258, 0.0
      %v260 = vld [vmem:[%s207] sm:$0x1]
      %v261 = vstv %s259
      %v262 = vadd.f32 %v260, %v261
      %vm263 = vcmask 0
      %264 = vst.msk [vmem:[%s207] sm:$0x1] %vm263, %v262
      %p265 = scmp.lt.s32.totalorder %s17, 1
      %s266 = scalar_select %p265, %s17, 1
      %s267 = scalar_lea.vmem %s2, %s266
      // Predicated region
      $region33: #{tpu_custom_call.1} parent=27 // pred_check
        %p268 = pneg %p107
      $region34: #{tpu_custom_call.1} parent=27 // pred_check_branch
        %270 = sbr.rel (%p268) target = $region36
      $region35: #{tpu_custom_call.1} parent=27 // pred_region
        _
      $region36: #{tpu_custom_call.1} parent=27 // pred_fallthru
        _
    $region28: #{tpu_custom_call.1} parent=5 // pred_fallthru
      _
    %p271 = scmp.le.s32.totalorder 2, %s8
    // Predicated region
    $region37: #{tpu_custom_call.1} parent=5 // pred_check
      %p272 = pneg %p271
    $region38: #{tpu_custom_call.1} parent=5 // pred_check_branch
      %274 = sbr.rel (%p272) target = $region40
    $region39: #{tpu_custom_call.1} parent=5 // pred_region
      %s275 = ssub.s32 %s8, 2
      // Predicated region
      $region41: #{tpu_custom_call.1} parent=39 // pred_check
        %p276 = pneg %p113
      $region42: #{tpu_custom_call.1} parent=39 // pred_check_branch
        %278 = sbr.rel (%p276) target = $region44
      $region43: #{tpu_custom_call.1} parent=39 // pred_region
        %p279 = scmp.lt.s32.totalorder %s19, 1
        %s280 = scalar_select %p279, %s19, 1
        %s281 = scalar_lea.vmem %s2, %s280
      $region44: #{tpu_custom_call.1} parent=39 // pred_fallthru
        _
    $region40: #{tpu_custom_call.1} parent=5 // pred_fallthru
      _
  $region6: #{tpu_custom_call.1} parent=0 // loop_footer
    %s12 = sadd.s32 1, %s8
  $region7: #{tpu_custom_call.1} parent=0 // loop_footer_branch
    %7 = sbr.rel target = $region3
  $region8: #{tpu_custom_call.1} parent=0 // loop_exit
    _

</llo_original>
